<compile_context>
chip_gen: v5e
topology: v5e:2x2
jax: 0.10.0
libtpu: 0.0.40
codegen_flags: <defaults>
</compile_context>

<pallas_src>
import functools
import math

import jax
import jax.numpy as jnp
from jax.experimental import pallas as pl
from jax.experimental.pallas import tpu as pltpu


def _sinusoidal_kernel(pos_ref, out_ref, *, half_dim: int, dim: int, pack: int, scale: float):
    """pos_ref: (TILE_R, pack) f32, out_ref: (TILE_R, pack*dim) out_dtype."""
    width = pack * dim
    half_pi = jnp.float32(math.pi / 2.0)
    neg_scale = jnp.float32(-scale)

    if pack == 1:
        # Float iota directly: no int->f32 convert needed.
        col_f = jax.lax.broadcasted_iota(jnp.float32, (1, width), 1)
        is_cos = col_f >= jnp.float32(half_dim)
        pos_full = pos_ref[...]                                   # (TILE_R, 1) -> broadcasts
    else:
        # Packed layout: lane l holds component (l & (dim-1)) of position (l >> log2(dim))
        # within this row.  dim is a power of two whenever pack > 1.
        lane = jax.lax.broadcasted_iota(jnp.int32, (1, width), 1)
        col = jnp.bitwise_and(lane, dim - 1)                      # lane % dim
        col_f = col.astype(jnp.float32)
        is_cos = col >= half_dim
        shift = dim.bit_length() - 1
        group = jnp.right_shift(lane, shift)                      # lane // dim
        pos = pos_ref[...]                                        # (TILE_R, pack)
        pos_full = pos[:, 0:1]
        for j in range(1, pack):                                  # pack <= 8 (dim >= 16)
            pos_full = jnp.where(group == j, pos[:, j:j + 1], pos_full)

    # Per-tile prologue: one exp (EUP) + a couple of selects, all (1, width).
    freq_idx = jnp.where(is_cos, col_f - jnp.float32(half_dim), col_f)
    freq = jnp.exp(freq_idx * neg_scale)                          # (1, width)
    phase = jnp.where(is_cos, half_pi, jnp.float32(0.0))          # (1, width)

    ang = pos_full * freq + phase                                 # (TILE_R, width)
    out_ref[...] = jnp.sin(ang).astype(out_ref.dtype)             # single lane-dense store


def _choose_tile_rows(rows: int, width: int, out_itemsize: int) -> int:
    # ~4 MiB per output buffer (double-buffered): safe for v5e/v6e/v7x scoped-VMEM
    # defaults even after counting tile-sized temporaries (pos_full/ang/sin).
    budget_bytes = 4 * 1024 * 1024
    max_rows = budget_bytes // (2 * width * out_itemsize)
    max_rows = max(8, (max_rows // 8) * 8)
    if rows < 16:
        return min(rows, max_rows)
    # Guarantee >= 2 grid steps so the "parallel" axis spans both TCs on v7x.
    two_step = ((-(-rows // 2) + 7) // 8) * 8
    return min(max_rows, two_step)


def sinusoidal_pos_emb(pos: jax.Array, dim: int, *,
                       out_dtype=jnp.float32, tile_rows: int | None = None) -> jax.Array:
    """Equivalent of SinusoidalPosEmb(dim).forward(pos). pos: (batch,) -> (batch, dim)."""
    assert dim % 2 == 0, "dimension must be even"
    assert dim >= 4, "dim must be >= 4 (half_dim - 1 divides by zero otherwise)"
    half_dim = dim // 2
    batch = pos.shape[0]
    scale = math.log(10000.0) / (half_dim - 1)

    # Lane packing: for small dim, fold k = 128 // dim positions per output row so
    # stores are full-lane.  Requires dim | 128, dim >= 16 (keeps the select chain
    # short), and batch divisible by k; otherwise fall back to the unpacked layout.
    pack = 1
    if dim < 128 and 128 % dim == 0 and dim >= 16 and batch % (128 // dim) == 0:
        pack = 128 // dim
    rows = batch // pack
    width = pack * dim

    pos2d = pos.astype(jnp.float32).reshape(rows, pack)
    out_itemsize = jnp.dtype(out_dtype).itemsize
    if tile_rows is None:
        tile_rows = _choose_tile_rows(rows, width, out_itemsize)
    grid = (pl.cdiv(rows, tile_rows),)

    kernel = functools.partial(_sinusoidal_kernel,
                               half_dim=half_dim, dim=dim, pack=pack, scale=scale)

    out = pl.pallas_call(
        kernel,
        out_shape=jax.ShapeDtypeStruct((rows, width), out_dtype),
        grid=grid,
        in_specs=[pl.BlockSpec((tile_rows, pack), lambda i: (i, 0))],
        out_specs=pl.BlockSpec((tile_rows, width), lambda i: (i, 0)),
        compiler_params=pltpu.CompilerParams(dimension_semantics=("parallel",)),
        cost_estimate=pl.CostEstimate(
            flops=2 * batch * dim,
            transcendentals=batch * dim,
            bytes_accessed=batch * dim * out_itemsize + batch * 4,
        ),
    )(pos2d)
    # Row-major (rows, k*dim) -> (batch, dim) is a pure view; no data movement.
    return out.reshape(batch, dim)


def _reference(pos: jax.Array, dim: int) -> jax.Array:
    half_dim = dim // 2
    emb = math.log(10000.0) / (half_dim - 1)
    emb = jnp.exp(jnp.arange(half_dim, dtype=jnp.float32) * -emb)
    emb = pos.astype(jnp.float32)[:, None] * emb[None, :]
    return jnp.concatenate([jnp.sin(emb), jnp.cos(emb)], axis=-1)


if __name__ == "__main__":
    key = jax.random.PRNGKey(0)

    # Case 1: tiny diffusion-timestep input, packed path (dim=32 -> 4 pos per row).
    b1, d1 = 8, 32
    pos1 = jax.random.uniform(key, (b1,), jnp.float32, 0.0, 1000.0)
    out1 = jax.block_until_ready(sinusoidal_pos_emb(pos1, d1))
    ref1 = _reference(pos1, d1)
    assert out1.shape == (b1, d1)
    assert jnp.allclose(out1, ref1, atol=2e-4, rtol=2e-4), "mismatch (small packed case)"

    # Case 2: larger batch, packed path with >= 2 grid steps (v7x megacore path).
    b2, d2 = 1024, 32
    pos2 = jax.random.uniform(jax.random.PRNGKey(1), (b2,), jnp.float32, 0.0, 1000.0)
    out2 = jax.block_until_ready(sinusoidal_pos_emb(pos2, d2))
    ref2 = _reference(pos2, d2)
    assert out2.shape == (b2, d2)
    assert jnp.allclose(out2, ref2, atol=2e-4, rtol=2e-4), "mismatch (tiled packed case)"

    # Case 3: unpacked fallback (dim not a divisor of 128), partial last tile.
    b3, d3 = 120, 192
    pos3 = jax.random.uniform(jax.random.PRNGKey(2), (b3,), jnp.float32, 0.0, 1000.0)
    out3 = jax.block_until_ready(sinusoidal_pos_emb(pos3, d3))
    ref3 = _reference(pos3, d3)
    assert out3.shape == (b3, d3)
    assert jnp.allclose(out3, ref3, atol=2e-4, rtol=2e-4), "mismatch (unpacked case)"

    # Case 4: optional bf16 output (write-bandwidth mode), looser tolerance.
    b4, d4 = 64, 64
    pos4 = jax.random.uniform(jax.random.PRNGKey(3), (b4,), jnp.float32, 0.0, 1000.0)
    out4 = jax.block_until_ready(sinusoidal_pos_emb(pos4, d4, out_dtype=jnp.bfloat16))
    ref4 = _reference(pos4, d4)
    assert out4.shape == (b4, d4)
    assert jnp.allclose(out4.astype(jnp.float32), ref4, atol=1e-2, rtol=1e-2), "mismatch (bf16 case)"

    print("KERNEL_OK")
</pallas_src>

<mosaic_0001>
module attributes {stable_mosaic.version = 11 : i64} {
  func.func @_sinusoidal_kernel(%arg0: i32, %arg1: memref<2x4xf32, #tpu.memory_space<vmem>>, %arg2: memref<2x128xf32, #tpu.memory_space<vmem>>) attributes {dimension_semantics = [#tpu.dimension_semantics<parallel>], iteration_bounds = array<i64: 1>, scalar_prefetch = 0 : i64, scratch_operands = 0 : i64, tpu.core_type = #tpu.core_type<tc>, window_params = [{transform_indices = @transform_0, window_bounds = array<i64: 2, 4>}, {transform_indices = @transform_1, window_bounds = array<i64: 2, 128>}]} {
    %0 = tpu.iota {dimensions = array<i32: 1>} : vector<1x128xi32>
    %c31_i32 = arith.constant 31 : i32
    %1 = vector.broadcast %c31_i32 : i32 to vector<1x128xi32>
    %2 = arith.andi %0, %1 : vector<1x128xi32>
    %3 = arith.sitofp %2 : vector<1x128xi32> to vector<1x128xf32>
    %c16_i32 = arith.constant 16 : i32
    %4 = vector.broadcast %c16_i32 : i32 to vector<1x128xi32>
    %5 = arith.cmpi sge, %2, %4 : vector<1x128xi32>
    %c5_i32 = arith.constant 5 : i32
    %6 = vector.broadcast %c5_i32 : i32 to vector<1x128xi32>
    %7 = arith.shrsi %0, %6 : vector<1x128xi32>
    %c0 = arith.constant 0 : index
    %c0_0 = arith.constant 0 : index
    %8 = vector.load %arg1[%c0, %c0_0] : memref<2x4xf32, #tpu.memory_space<vmem>>, vector<2x4xf32>
    %9 = vector.extract_strided_slice %8 {offsets = [0, 0], sizes = [2, 1], strides = [1, 1]} : vector<2x4xf32> to vector<2x1xf32>
    %c1_i32 = arith.constant 1 : i32
    %10 = vector.broadcast %c1_i32 : i32 to vector<1x128xi32>
    %11 = arith.cmpi eq, %7, %10 : vector<1x128xi32>
    %12 = vector.extract_strided_slice %8 {offsets = [0, 1], sizes = [2, 1], strides = [1, 1]} : vector<2x4xf32> to vector<2x1xf32>
    %13 = vector.shape_cast %11 : vector<1x128xi1> to vector<1x128xi1>
    %14 = vector.broadcast %13 : vector<1x128xi1> to vector<2x128xi1>
    %15 = vector.shape_cast %12 : vector<2x1xf32> to vector<2x1xf32>
    %16 = vector.broadcast %15 : vector<2x1xf32> to vector<2x128xf32>
    %17 = vector.shape_cast %9 : vector<2x1xf32> to vector<2x1xf32>
    %18 = vector.broadcast %17 : vector<2x1xf32> to vector<2x128xf32>
    %19 = arith.select %14, %16, %18 : vector<2x128xi1>, vector<2x128xf32>
    %c2_i32 = arith.constant 2 : i32
    %20 = vector.broadcast %c2_i32 : i32 to vector<1x128xi32>
    %21 = arith.cmpi eq, %7, %20 : vector<1x128xi32>
    %22 = vector.extract_strided_slice %8 {offsets = [0, 2], sizes = [2, 1], strides = [1, 1]} : vector<2x4xf32> to vector<2x1xf32>
    %23 = vector.shape_cast %21 : vector<1x128xi1> to vector<1x128xi1>
    %24 = vector.broadcast %23 : vector<1x128xi1> to vector<2x128xi1>
    %25 = vector.shape_cast %22 : vector<2x1xf32> to vector<2x1xf32>
    %26 = vector.broadcast %25 : vector<2x1xf32> to vector<2x128xf32>
    %27 = arith.select %24, %26, %19 : vector<2x128xi1>, vector<2x128xf32>
    %c3_i32 = arith.constant 3 : i32
    %28 = vector.broadcast %c3_i32 : i32 to vector<1x128xi32>
    %29 = arith.cmpi eq, %7, %28 : vector<1x128xi32>
    %30 = vector.extract_strided_slice %8 {offsets = [0, 3], sizes = [2, 1], strides = [1, 1]} : vector<2x4xf32> to vector<2x1xf32>
    %31 = vector.shape_cast %29 : vector<1x128xi1> to vector<1x128xi1>
    %32 = vector.broadcast %31 : vector<1x128xi1> to vector<2x128xi1>
    %33 = vector.shape_cast %30 : vector<2x1xf32> to vector<2x1xf32>
    %34 = vector.broadcast %33 : vector<2x1xf32> to vector<2x128xf32>
    %35 = arith.select %32, %34, %27 : vector<2x128xi1>, vector<2x128xf32>
    %cst = arith.constant 1.600000e+01 : f32
    %36 = vector.broadcast %cst : f32 to vector<1x128xf32>
    %37 = arith.subf %3, %36 : vector<1x128xf32>
    %38 = arith.select %5, %37, %3 : vector<1x128xi1>, vector<1x128xf32>
    %cst_1 = arith.constant -0.614022672 : f32
    %39 = vector.broadcast %cst_1 : f32 to vector<1x128xf32>
    %40 = arith.mulf %38, %39 : vector<1x128xf32>
    %41 = math.exp %40 : vector<1x128xf32>
    %cst_2 = arith.constant 1.57079637 : f32
    %cst_3 = arith.constant 0.000000e+00 : f32
    %42 = vector.broadcast %cst_2 : f32 to vector<1x128xf32>
    %43 = vector.broadcast %cst_3 : f32 to vector<1x128xf32>
    %44 = arith.select %5, %42, %43 : vector<1x128xi1>, vector<1x128xf32>
    %45 = vector.broadcast %41 : vector<1x128xf32> to vector<2x128xf32>
    %46 = arith.mulf %35, %45 : vector<2x128xf32>
    %47 = vector.broadcast %44 : vector<1x128xf32> to vector<2x128xf32>
    %48 = arith.addf %46, %47 : vector<2x128xf32>
    %49 = math.sin %48 : vector<2x128xf32>
    %c0_4 = arith.constant 0 : index
    %c0_5 = arith.constant 0 : index
    %50 = vector.load %arg2[%c0_4, %c0_5] : memref<2x128xf32, #tpu.memory_space<vmem>>, vector<2x128xf32>
    tpu.vector_store %arg2[%c0_4, %c0_5], %49 {strides = array<i32>} : memref<2x128xf32, #tpu.memory_space<vmem>>, vector<2x128xf32>,
    return
  }
  func.func @transform_0(%arg0: i32) -> (i32, i32) {
    %c0_i32 = arith.constant 0 : i32
    %c0_i32_0 = arith.constant 0 : i32
    return %arg0, %c0_i32 : i32, i32
  }
  func.func @transform_1(%arg0: i32) -> (i32, i32) {
    %c0_i32 = arith.constant 0 : i32
    %c0_i32_0 = arith.constant 0 : i32
    return %arg0, %c0_i32 : i32, i32
  }
}

</mosaic_0001>

<llo_original>
// kernel: tpu_custom_call.1
$region0: #{tpu_custom_call.1}
  #allocation0 [shape = 'u32[]', space=smem, size = 0x4, offset = 0x4, fixed_abs, tag = 'smem constant byte address 0x4 - core index']
  #allocation1 [shape = 'u32[72,128]{1,0:T(1,128)}', space=vmem, size = 0x9000, scoped, tag = 'internal scratch']
  %s0 = inlined_call_operand.hbm [shape: f32[2,4], index: 0, kind: input, shape index: {}]
  %s1 = inlined_call_operand.hbm [shape: f32[2,128], index: 1, kind: output, shape index: {}]
  %s2 = sld [smem:[#allocation0]]
  $region18: #{tpu_custom_call.1} parent=0
    _
  %s4 = ssub.s32 1, %s2
  %s5 = scalar_select 0, %s4, %s2
  $region1: #{tpu_custom_call.1} parent=0
    #allocation2 [shape = 'u8[1024]{0}', space=vmem, size = 0x400, scoped, tag = 'input window, operand 0, single buffered']
    #allocation3 [shape = 's32[1]{0}', space=sflag, size = 0x4, scoped, tag = 'scoped memory for tpu_custom_call.1']
    #allocation4 [shape = 's32[1]{0}', space=sflag, size = 0x4, scoped, tag = 'scoped memory for tpu_custom_call.1']
    #allocation5 [shape = 'u8[1024]{0}', space=vmem, size = 0x400, scoped, tag = 'output window, operand 0, single buffered']
    %6 = vsyncpa [#allocation3], 0
    %7 = vsyncpa [#allocation4], 0
    // Predicated region
    $region2: #{tpu_custom_call.1} parent=1 // pred_check
      _
    $region3: #{tpu_custom_call.1} parent=1 // pred_check_branch
      %9 = sbr.rel (0) target = $region5
    $region4: #{tpu_custom_call.1} parent=1 // pred_region
      %11 = vsyncadd [#allocation3], 0
      %s13 = sshll.u32 %s0, 4
      %s14 = int_to_ptr.hbm [resolvable:$true] %s13
      %s15 = sshll.u32 [#allocation2], 4
      %s16 = int_to_ptr.vmem [resolvable:$true] %s15
      %18 = dma.hbm_to_vmem [thread:$0]  %s14, 32, %s16, [#allocation3]
    $region5: #{tpu_custom_call.1} parent=1 // pred_fallthru
      _
    // Predicated region
    $region6: #{tpu_custom_call.1} parent=1 // pred_check
      _
    $region7: #{tpu_custom_call.1} parent=1 // pred_check_branch
      %20 = sbr.rel (0) target = $region9
    $region8: #{tpu_custom_call.1} parent=1 // pred_region
      %22 = dma.done [#allocation3], 32
    $region9: #{tpu_custom_call.1} parent=1 // pred_fallthru
      _
    %v23 = vlaneseq
    %v24 = vand.u32 %v23, 127
    %v25 = vand.u32 %v24, 31
    %v26 = vcvt.s32.f32 %v25
    %vm27 = vcmp.ge.s32.totalorder %v25, 16
    %v28 = vshra.s32 %v24, 5
    %v29 = vld [vmem:[#allocation2] sm:$0x3]
    %vm30 = vcmp.eq.s32.totalorder %v28, 1
    %v31 = vsel %vm30, 1, 0
    %vm32 = vcmp.eq.s32.totalorder %v31, 1
    %34 = vset.pattern.permute.xlu0 1
    %35 = vperm.xlu0 %34, %v29
    %v36 = vpop.permute.xlu0 %35
    %38 = vset.pattern.permute.xlu0 0
    %39 = vperm.xlu0 %38, %v29
    %v40 = vpop.permute.xlu0 %39
    %v42 = vsel %vm32, %v36, %v40
    %vm43 = vcmp.eq.s32.totalorder %v28, 2
    %v44 = vsel %vm43, 1, 0
    %vm45 = vcmp.eq.s32.totalorder %v44, 1
    %46 = vset.pattern.permute.xlu0 2
    %47 = vperm.xlu0 %46, %v29
    %v48 = vpop.permute.xlu0 %47
    %v50 = vsel %vm45, %v48, %v42
    %vm51 = vcmp.eq.s32.totalorder %v28, 3
    %v52 = vsel %vm51, 1, 0
    %vm53 = vcmp.eq.s32.totalorder %v52, 1
    %54 = vset.pattern.permute.xlu0 3
    %55 = vperm.xlu0 %54, %v29
    %v56 = vpop.permute.xlu0 %55
    %v58 = vsel %vm53, %v56, %v50
    %v59 = vsub.f32 %v26, 16.0
    %v60 = vsel %vm27, %v59, %v26
    %v61 = vmul.f32 %v60, -0.6140227
    %v62 = vmul.f32 %v61, 1.442695
    %v63 = vpow.pop %v62
    %v64 = vsel %vm27, 1.5707964, 0.0
    %v65 = vmul.f32 %v58, %v63
    %v66 = vadd.f32 %v65, %v64
    %v67 = vand.u32 2147483647, %v66
    %vm68 = vcmp.le.f32.partialorder %v67, 0.7853982
    %vm69 = vcmp.lt.s32.totalorder %v66, 0
    %v70 = vand.u32 %v66, 2139095040
    %v71 = vshrl.u32 %v70, 23
    %v72 = vsub.s32 %v71, 127
    %v73 = vand.u32 2147483647, %v66
    %v74 = vand.u32 %v73, 8388607
    %v75 = vor.u32 %v74, 8388608
    %v76 = vsub.s32 0, %v75
    %v77 = vadd.s32 %v72, 1
    %vm78 = vcmp.gt.s32.totalorder %v77, 0
    %v79 = vsel %vm78, %v77, 0
    %v80 = vshrl.u32 %v79, 5
    %v81 = vand.u32 %v79, 31
    %v82 = vsub.s32 32, %v81
    %v83 = vshrl.u32 683565275, %v82
    %v84 = vshll.u32 683565275, %v81
    %v85 = vshrl.u32 2475754826, %v82
    %v86 = vor.u32 %v84, %v85
    %v87 = vshll.u32 2475754826, %v81
    %v88 = vshrl.u32 2131351028, %v82
    %v89 = vor.u32 %v87, %v88
    %v90 = vshll.u32 2131351028, %v81
    %v91 = vshrl.u32 2102212464, %v82
    %v92 = vor.u32 %v90, %v91
    %v93 = vshll.u32 2102212464, %v81
    %v94 = vshrl.u32 920167782, %v82
    %v95 = vor.u32 %v93, %v94
    %v96 = vshll.u32 920167782, %v81
    %v97 = vshrl.u32 1326507024, %v82
    %v98 = vor.u32 %v96, %v97
    %vm99 = vcmp.lt.s32.totalorder %v80, 1
    %vm100 = vcmp.lt.s32.totalorder %v80, 2
    %vm101 = vcmp.lt.s32.totalorder %v80, 3
    %vm102 = vcmp.lt.s32.totalorder %v80, 4
    %v103 = vsel %vm99, %v83, %v86
    %v104 = vsel %vm102, %v92, 2102212464
    %v105 = vsel %vm101, %v89, %v104
    %v106 = vsel %vm100, %v103, %v105
    %v107 = vsel %vm99, %v86, %v89
    %v108 = vsel %vm102, %v95, 920167782
    %v109 = vsel %vm101, %v92, %v108
    %v110 = vsel %vm100, %v107, %v109
    %v111 = vsel %vm99, %v89, %v92
    %v112 = vsel %vm102, %v98, 1326507024
    %v113 = vsel %vm101, %v95, %v112
    %v114 = vsel %vm100, %v111, %v113
    %v115 = vshll.u32 %v75, 8
    %v116 = vand.u32 %v115, 65535
    %v117 = vshrl.u32 %v115, 16
    %v118 = vand.u32 %v114, 65535
    %v119 = vshrl.u32 %v114, 16
    %v120 = vmul.u32 %v116, %v118
    %v121 = vmul.u32 %v116, %v119
    %v122 = vmul.u32 %v117, %v118
    %v123 = vmul.u32 %v117, %v119
    %v124 = vshll.u32 %v121, 16
    %v125 = vshrl.u32 %v121, 16
    %v126 = vshll.u32 %v122, 16
    %v127 = vshrl.u32 %v122, 16
    %vm128 = vc.u32 %v120, %v124
    %v129 = vsel %vm128, 1, 0
    %v130 = vadd.s32 %v120, %v124
    %v131 = vadd.s32 %v123, %v129
    %vm132 = vc.u32 %v130, %v126
    %v133 = vsel %vm132, 1, 0
    %v134 = vadd.s32 %v130, %v126
    %v135 = vadd.s32 %v131, %v133
    %v136 = vadd.s32 %v135, %v125
    %v137 = vadd.s32 %v136, %v127
    %v138 = vand.u32 %v115, 65535
    %v139 = vshrl.u32 %v115, 16
    %v140 = vand.u32 %v110, 65535
    %v141 = vshrl.u32 %v110, 16
    %v142 = vmul.u32 %v138, %v140
    %v143 = vmul.u32 %v138, %v141
    %v144 = vmul.u32 %v139, %v140
    %v145 = vmul.u32 %v139, %v141
    %v146 = vshll.u32 %v143, 16
    %v147 = vshrl.u32 %v143, 16
    %v148 = vshll.u32 %v144, 16
    %v149 = vshrl.u32 %v144, 16
    %vm150 = vc.u32 %v142, %v146
    %v151 = vsel %vm150, 1, 0
    %v152 = vadd.s32 %v142, %v146
    %v153 = vadd.s32 %v145, %v151
    %vm154 = vc.u32 %v152, %v148
    %v155 = vsel %vm154, 1, 0
    %v156 = vadd.s32 %v152, %v148
    %v157 = vadd.s32 %v153, %v155
    %v158 = vadd.s32 %v157, %v147
    %v159 = vadd.s32 %v158, %v149
    %v160 = vmul.u32 %v115, %v106
    %v161 = vadd.s32 %v137, %v156
    %vm162 = vc.u32 %v137, %v156
    %v163 = vadd.s32 %v159, 1
    %v164 = vsel %vm162, %v163, %v159
    %v165 = vadd.s32 %v160, %v164
    %v166 = vadd.s32 %v165, 536870912
    %v167 = vshrl.u32 %v166, 30
    %v168 = vshll.u32 %v167, 30
    %v169 = vsub.s32 %v165, %v168
    %vm170 = vcmp.lt.s32.totalorder %v169, 0
    %v171 = vsub.s32 0, %v169
    %v172 = vsel %vm170, %v171, %v169
    %v173 = vclz %v172
    %v174 = vsub.s32 %v173, 2
    %vm175 = vcmp.gt.s32.totalorder 0, %v174
    %v176 = vsel %vm175, 0, %v174
    %v177 = vsub.s32 32, %v176
    %v178 = vshll.u32 %v169, %v176
    %v179 = vshrl.u32 %v161, %v177
    %v180 = vor.u32 %v178, %v179
    %v181 = vsub.s32 4294967266, %v176
    %v182 = vadd.s32 %v181, 127
    %v183 = vshll.u32 %v182, 23
    %v184 = vor.u32 4788187, %v183
    %v185 = vand.u32 2147483647, %v184
    %v187 = vcvt.s32.f32 %v180
    %v188 = vmul.f32 %v187, %v185
    %v189 = vxor.u32 %v188, 2147483648
    %v190 = vsel %vm69, %v189, %v188
    %v191 = vsub.s32 4, %v167
    %v192 = vsel %vm69, %v191, %v167
    %v193 = vsel %vm68, %v66, %v190
    %v194 = vsel %vm68, 0, %v192
    %v195 = vmul.f32 %v193, %v193
    %v196 = vmul.f32 %v195, -0.001358992
    %v197 = vadd.f32 %v196, 0.041655596
    %v198 = vmul.f32 %v195, %v197
    %v199 = vadd.f32 %v198, -0.4999988
    %v200 = vmul.f32 %v195, %v199
    %v201 = vadd.f32 1.0, %v200
    %v202 = vmul.f32 %v193, %v193
    %v203 = vmul.f32 %v202, -0.00019511016
    %v204 = vadd.f32 %v203, 0.008332121
    %v205 = vmul.f32 %v202, %v204
    %v206 = vadd.f32 %v205, -0.16666654
    %v207 = vmul.f32 %v202, %v206
    %v208 = vadd.f32 %v207, 1.0
    %v209 = vmul.f32 %v208, %v193
    %vm210 = vweird.f32 %v66
    %v211 = vadd.s32 %v194, 3
    %v212 = vand.u32 %v211, 3
    %vm213 = vcmp.lt.s32.totalorder %v212, 2
    %vm214 = vcmp.eq.s32.totalorder %v212, 0
    %v215 = vxor.u32 %v209, 2147483648
    %v216 = vsel %vm214, %v201, %v215
    %vm217 = vcmp.eq.s32.totalorder %v212, 2
    %v218 = vxor.u32 %v201, 2147483648
    %v219 = vsel %vm217, %v218, %v209
    %v220 = vsel %vm213, %v216, %v219
    %v221 = vsel %vm210, nan, %v220
    %222 = vst [vmem:[#allocation5] sm:$0x3] %v221
    // Predicated region
    $region10: #{tpu_custom_call.1} parent=1 // pred_check
      _
    $region11: #{tpu_custom_call.1} parent=1 // pred_check_branch
      %224 = sbr.rel (0) target = $region13
    $region12: #{tpu_custom_call.1} parent=1 // pred_region
      %226 = vsyncadd [#allocation4], 0
      %s228 = sshll.u32 [#allocation5], 4
      %s229 = int_to_ptr.vmem [resolvable:$true] %s228
      %s230 = sshll.u32 %s1, 4
      %s231 = int_to_ptr.hbm [resolvable:$true] %s230
      %233 = dma.vmem_to_hbm [thread:$0]  %s229, 32, %s231, [#allocation4]
    $region13: #{tpu_custom_call.1} parent=1 // pred_fallthru
      _
    // Predicated region
    $region14: #{tpu_custom_call.1} parent=1 // pred_check
      _
    $region15: #{tpu_custom_call.1} parent=1 // pred_check_branch
      %235 = sbr.rel (0) target = $region17
    $region16: #{tpu_custom_call.1} parent=1 // pred_region
      %237 = dma.done [#allocation4], 32
    $region17: #{tpu_custom_call.1} parent=1 // pred_fallthru
      _
    %238 = vsyncpa [#allocation3], 1
    %239 = vsyncpa [#allocation4], 1

</llo_original>
